<compile_context>
chip_gen: v5e
topology: v5e:2x2
jax: 0.10.0
libtpu: 0.0.40
codegen_flags: <defaults>
</compile_context>

<pallas_src>
import math
from typing import NamedTuple, Optional

import jax
import jax.numpy as jnp
from jax.experimental import pallas as pl
from jax.experimental.pallas import tpu as pltpu


def _round_up(x: int, m: int) -> int:
    return ((x + m - 1) // m) * m


def _round_down(x: int, m: int) -> int:
    return (x // m) * m


# ---------------------------------------------------------------------------
# Kernels
# ---------------------------------------------------------------------------

def ffn_kernel_inplace(x_ref, w1_ref, b1_ref, w2_ref, b2_ref, o_ref):
    """out dtype == float32: accumulate directly into the resident output tile."""
    kff = pl.program_id(1)

    @pl.when(kff == 0)
    def _():
        # Fold bias2 into the accumulator init.
        o_ref[...] = jnp.broadcast_to(b2_ref[...], o_ref.shape)

    # First matmul (MXU), f32 accumulation; bias + ReLU on the VPU are free filler.
    h = jnp.dot(x_ref[...], w1_ref[...], preferred_element_type=jnp.float32)
    h = jnp.maximum(h + b1_ref[...], 0.0)
    # Dropout == identity at inference.

    # Second matmul: accumulate this d_ff slab's contribution in float32.
    o_ref[...] += jnp.dot(h.astype(w2_ref.dtype), w2_ref[...],
                          preferred_element_type=jnp.float32)


def ffn_kernel_acc(x_ref, w1_ref, b1_ref, w2_ref, b2_ref, o_ref, acc_ref):
    """out dtype != float32: accumulate in a f32 scratch, cast once at the end."""
    kff = pl.program_id(1)

    @pl.when(kff == 0)
    def _():
        acc_ref[...] = jnp.broadcast_to(b2_ref[...], acc_ref.shape)

    h = jnp.dot(x_ref[...], w1_ref[...], preferred_element_type=jnp.float32)
    h = jnp.maximum(h + b1_ref[...], 0.0)

    acc_ref[...] += jnp.dot(h.astype(w2_ref.dtype), w2_ref[...],
                            preferred_element_type=jnp.float32)

    @pl.when(kff == pl.num_programs(1) - 1)
    def _():
        o_ref[...] = acc_ref[...].astype(o_ref.dtype)


# ---------------------------------------------------------------------------
# Weight preparation (hoisted out of the per-call path)
# ---------------------------------------------------------------------------

class PreparedFFNParams(NamedTuple):
    w1p: jax.Array   # (Dp, Fp)  compute dtype, (in, out) layout, zero-padded
    b1p: jax.Array   # (1, Fp)   float32
    w2p: jax.Array   # (Fp, Dp)  compute dtype, (in, out) layout, zero-padded
    b2p: jax.Array   # (1, Dp)   float32
    d_model: int
    d_ff: int


def prepare_ffn_params(w1, b1, w2, b2, compute_dtype=jnp.bfloat16) -> PreparedFFNParams:
    """Cast + zero-pad weights once; reuse across calls to avoid per-call HBM traffic.

    w1: (d_model, d_ff), w2: (d_ff, d_model) -- already (in, out) layout.
    Zero-padding is mathematically inert: padded W1 columns give ReLU(0)=0 and padded
    W2 rows contribute nothing.
    """
    d_model, d_ff = w1.shape
    Dp = _round_up(d_model, 128)
    Fp = _round_up(d_ff, 128)
    w1p = jnp.pad(w1.astype(compute_dtype), ((0, Dp - d_model), (0, Fp - d_ff)))
    b1p = jnp.pad(b1.astype(jnp.float32).reshape(1, d_ff), ((0, 0), (0, Fp - d_ff)))
    w2p = jnp.pad(w2.astype(compute_dtype), ((0, Fp - d_ff), (0, Dp - d_model)))
    b2p = jnp.pad(b2.astype(jnp.float32).reshape(1, d_model), ((0, 0), (0, Dp - d_model)))
    return PreparedFFNParams(w1p, b1p, w2p, b2p, d_model, d_ff)


# ---------------------------------------------------------------------------
# Generation-aware tiling defaults
# ---------------------------------------------------------------------------

def _tpu_generation_defaults():
    """Return (tm_default, tn_default, vmem_cap_bytes, multi_core)."""
    vmem_phys = None
    try:
        vmem_phys = int(pltpu.get_tpu_info().vmem_capacity_bytes)
    except Exception:
        vmem_phys = None
    kind = ""
    try:
        kind = jax.devices()[0].device_kind.lower()
    except Exception:
        pass

    # v7x-class: 64 MiB physical VMEM, 2 TensorCores/chip.
    if (vmem_phys is not None and vmem_phys <= (64 << 20)) or "7" in kind:
        cap = 52 << 20
        if vmem_phys is not None:
            cap = max(32 << 20, min(cap, vmem_phys - (12 << 20)))
        return 512, 512, int(cap), True
    # v5e: low peak/BW ratio -> tm=256 is already compute-bound in bf16.
    if "v5" in kind:
        return 256, 512, int(100 << 20), False
    # v6e (or any 128-MiB chip): high peak/BW ratio -> large token tile.
    if "v6" in kind or (vmem_phys is not None and vmem_phys >= (100 << 20)):
        return 768, 512, int(100 << 20), False
    # Unknown: conservative.
    return 384, 512, int(48 << 20), False


def _footprint_bytes(tm, tn, Dp, cbytes, obytes, use_acc):
    """Double-buffered pipelined I/O + f32 h intermediate (+ optional f32 accumulator)."""
    f = (2 * tm * Dp * cbytes          # x tile
         + 2 * Dp * tn * cbytes        # W1 slab
         + 2 * tn * 4                  # b1 slab (f32)
         + 2 * tn * Dp * cbytes        # W2 slab
         + 2 * Dp * 4                  # b2 (f32)
         + 2 * tm * Dp * obytes        # output tile
         + tm * tn * 4)                # f32 h intermediate
    if use_acc:
        f += tm * Dp * 4               # f32 accumulator scratch
    return f


# ---------------------------------------------------------------------------
# Wrapper
# ---------------------------------------------------------------------------

def feed_forward_network(x, w1=None, b1=None, w2=None, b2=None, *,
                         params: Optional[PreparedFFNParams] = None,
                         tm: Optional[int] = None, tn_ff: int = 512,
                         compute_dtype=jnp.bfloat16):
    """x: (batch, seq, d_model). Either pass raw (w1, b1, w2, b2) or a pre-prepared
    `params=prepare_ffn_params(...)` (preferred — avoids per-call weight cast/pad).

    Returns (batch, seq, d_model) in x.dtype. Matmul operands use `compute_dtype`
    (default bfloat16); accumulation is always float32.
    """
    B, S, D_in = x.shape
    out_dtype = x.dtype

    if params is None:
        params = prepare_ffn_params(w1, b1, w2, b2, compute_dtype)
    w1p, b1p, w2p, b2p, d_model, d_ff = params
    assert d_model == D_in, "x last dim must match d_model"
    compute_dtype = w1p.dtype
    Dp, Fp = w1p.shape

    tokens = B * S
    T128 = _round_up(tokens, 128)

    tm_def, _tn_def, vmem_cap, multi_core = _tpu_generation_defaults()
    if tm is None:
        tm = tm_def
    tm = max(128, _round_up(tm, 128))
    tn_ff = max(128, _round_up(tn_ff, 128))

    # d_ff slab width: largest 128-multiple <= tn_ff that divides Fp (no over-padding).
    tn_eff = max(128, _round_down(min(tn_ff, Fp), 128))
    while Fp % tn_eff:
        tn_eff -= 128

    tm_eff = min(tm, T128)
    # v7x: keep >= 2 token tiles so the 'parallel' axis shards across both TensorCores.
    if multi_core and T128 >= 256:
        tm_eff = min(tm_eff, max(128, _round_down(T128 // 2, 128)))

    cbytes = jnp.dtype(compute_dtype).itemsize
    obytes = jnp.dtype(out_dtype).itemsize
    use_acc = out_dtype != jnp.float32

    # Shrink tiles until the footprint (+ ~16 MiB internal scratch headroom) fits VMEM.
    margin = 16 << 20
    while (_footprint_bytes(tm_eff, tn_eff, Dp, cbytes, obytes, use_acc) + margin
           > vmem_cap) and tm_eff > 128:
        tm_eff -= 128
    while (_footprint_bytes(tm_eff, tn_eff, Dp, cbytes, obytes, use_acc) + margin
           > vmem_cap) and tn_eff > 128:
        nt = tn_eff - 128
        while nt > 128 and Fp % nt:
            nt -= 128
        tn_eff = nt

    Tp = _round_up(tokens, tm_eff)
    grid = (Tp // tm_eff, Fp // tn_eff)

    # Activation prep: cast if needed, pad only when not already aligned.
    x2d = x.reshape(tokens, D_in)
    if x2d.dtype != compute_dtype:
        x2d = x2d.astype(compute_dtype)
    if Tp != tokens or Dp != D_in:
        x2d = jnp.pad(x2d, ((0, Tp - tokens), (0, Dp - D_in)))

    footprint = _footprint_bytes(tm_eff, tn_eff, Dp, cbytes, obytes, use_acc)
    vmem_limit = int(min(vmem_cap, max(footprint + margin, 32 << 20)))

    grid0 = grid[0]
    flops = 4 * Tp * Dp * Fp  # two matmuls, 2*M*N*K each
    bytes_accessed = (x2d.size * cbytes
                      + grid0 * (w1p.size + w2p.size) * cbytes   # weights re-streamed per token tile
                      + grid0 * (b1p.size + b2p.size) * 4
                      + Tp * Dp * obytes)

    in_specs = [
        pl.BlockSpec((tm_eff, Dp), lambda i, k: (i, 0)),   # x tile (constant over kff)
        pl.BlockSpec((Dp, tn_eff), lambda i, k: (0, k)),   # W1 slab
        pl.BlockSpec((1, tn_eff), lambda i, k: (0, k)),    # b1 slab
        pl.BlockSpec((tn_eff, Dp), lambda i, k: (k, 0)),   # W2 slab
        pl.BlockSpec((1, Dp), lambda i, k: (0, 0)),        # b2 (constant)
    ]
    out_spec = pl.BlockSpec((tm_eff, Dp), lambda i, k: (i, 0))

    if use_acc:
        kernel = ffn_kernel_acc
        scratch = [pltpu.VMEM((tm_eff, Dp), jnp.float32)]
    else:
        kernel = ffn_kernel_inplace
        scratch = []

    out2d = pl.pallas_call(
        kernel,
        out_shape=jax.ShapeDtypeStruct((Tp, Dp), out_dtype),
        grid_spec=pltpu.PrefetchScalarGridSpec(
            num_scalar_prefetch=0,
            grid=grid,
            in_specs=in_specs,
            out_specs=out_spec,
            scratch_shapes=scratch,
        ),
        compiler_params=pltpu.CompilerParams(
            dimension_semantics=("parallel", "arbitrary"),
            vmem_limit_bytes=vmem_limit,
        ),
        cost_estimate=pl.CostEstimate(
            flops=flops, transcendentals=0, bytes_accessed=bytes_accessed),
    )(x2d, w1p, b1p, w2p, b2p)

    if Tp != tokens or Dp != D_in:
        out2d = out2d[:tokens, :D_in]
    return out2d.reshape(B, S, D_in)


def init_params(key, d_model, d_ff):
    """Deterministic PyTorch-style (Kaiming-uniform-ish) init.

    Weights are stored transposed relative to torch.nn.Linear: (in, out).
    """
    k1, k2, k3, k4 = jax.random.split(key, 4)
    bound1 = 1.0 / math.sqrt(d_model)   # fan_in of linear1
    bound2 = 1.0 / math.sqrt(d_ff)      # fan_in of linear2
    w1 = jax.random.uniform(k1, (d_model, d_ff), jnp.float32, -bound1, bound1)
    b1 = jax.random.uniform(k2, (d_ff,), jnp.float32, -bound1, bound1)
    w2 = jax.random.uniform(k3, (d_ff, d_model), jnp.float32, -bound2, bound2)
    b2 = jax.random.uniform(k4, (d_model,), jnp.float32, -bound2, bound2)
    return w1, b1, w2, b2


if __name__ == "__main__":
    batch, seq, d_model, d_ff = 2, 8, 32, 64

    key = jax.random.PRNGKey(0)
    kx, kp = jax.random.split(key)
    x = jax.random.normal(kx, (batch, seq, d_model), jnp.float32)
    w1, b1, w2, b2 = init_params(kp, d_model, d_ff)

    # Reference in plain JAX (same math; dropout is identity at eval).
    ref = jnp.maximum(x @ w1 + b1, 0.0) @ w2 + b2

    # Fast path: bf16 operands + f32 accumulation, prepared weights reused across calls.
    prep_bf16 = prepare_ffn_params(w1, b1, w2, b2, compute_dtype=jnp.bfloat16)
    out = feed_forward_network(x, params=prep_bf16)
    out = jax.block_until_ready(out)
    assert out.shape == x.shape
    assert jnp.allclose(out, ref, atol=5e-2, rtol=5e-2), "bf16 path mismatch vs reference"

    # bf16 output path exercises the scratch-accumulator kernel variant.
    out_bf = feed_forward_network(x.astype(jnp.bfloat16), params=prep_bf16)
    out_bf = jax.block_until_ready(out_bf)
    assert out_bf.dtype == jnp.bfloat16
    assert jnp.allclose(out_bf.astype(jnp.float32), ref, atol=1e-1, rtol=1e-1), \
        "bf16-output path mismatch vs reference"

    # Exact path: f32 operands for tight comparison against the f32 reference.
    out_f32 = feed_forward_network(x, w1, b1, w2, b2, compute_dtype=jnp.float32)
    out_f32 = jax.block_until_ready(out_f32)
    assert jnp.allclose(out_f32, ref, atol=1e-5, rtol=1e-5), "f32 path mismatch vs reference"

    print("KERNEL_OK")
</pallas_src>

<mosaic_0001>
module attributes {stable_mosaic.version = 11 : i64} {
  func.func @ffn_kernel_inplace(%arg0: i32, %arg1: i32, %arg2: memref<128x128xbf16, #tpu.memory_space<vmem>>, %arg3: memref<128x128xbf16, #tpu.memory_space<vmem>>, %arg4: memref<1x128xf32, #tpu.memory_space<vmem>>, %arg5: memref<128x128xbf16, #tpu.memory_space<vmem>>, %arg6: memref<1x128xf32, #tpu.memory_space<vmem>>, %arg7: memref<128x128xf32, #tpu.memory_space<vmem>>) attributes {dimension_semantics = [#tpu.dimension_semantics<parallel>, #tpu.dimension_semantics<arbitrary>], iteration_bounds = array<i64: 1, 1>, scalar_prefetch = 0 : i64, scratch_operands = 0 : i64, tpu.core_type = #tpu.core_type<tc>, window_params = [{transform_indices = @transform_0, window_bounds = array<i64: 128, 128>}, {transform_indices = @transform_1, window_bounds = array<i64: 128, 128>}, {transform_indices = @transform_2, window_bounds = array<i64: 1, 128>}, {transform_indices = @transform_3, window_bounds = array<i64: 128, 128>}, {pipeline_mode = #tpu.pipeline_mode<synchronous>, transform_indices = @transform_4, window_bounds = array<i64: 1, 128>}, {transform_indices = @transform_5, window_bounds = array<i64: 128, 128>}]} {
    %c0_i32 = arith.constant 0 : i32
    %0 = arith.cmpi eq, %arg1, %c0_i32 : i32
    %1 = arith.extui %0 : i1 to i32
    %c0_i32_0 = arith.constant 0 : i32
    %2 = arith.cmpi ne, %1, %c0_i32_0 : i32
    scf.if %2 {
      %c0_14 = arith.constant 0 : index
      %c0_15 = arith.constant 0 : index
      %17 = vector.load %arg6[%c0_14, %c0_15] : memref<1x128xf32, #tpu.memory_space<vmem>>, vector<1x128xf32>
      %18 = vector.shape_cast %17 : vector<1x128xf32> to vector<1x128xf32>
      %19 = vector.broadcast %18 : vector<1x128xf32> to vector<128x128xf32>
      %c0_16 = arith.constant 0 : index
      %c0_17 = arith.constant 0 : index
      %20 = vector.load %arg7[%c0_16, %c0_17] : memref<128x128xf32, #tpu.memory_space<vmem>>, vector<128x128xf32>
      tpu.vector_store %arg7[%c0_16, %c0_17], %19 {strides = array<i32>} : memref<128x128xf32, #tpu.memory_space<vmem>>, vector<128x128xf32>,
    } else {
    }
    %c0 = arith.constant 0 : index
    %c0_1 = arith.constant 0 : index
    %3 = vector.load %arg2[%c0, %c0_1] : memref<128x128xbf16, #tpu.memory_space<vmem>>, vector<128x128xbf16>
    %c0_2 = arith.constant 0 : index
    %c0_3 = arith.constant 0 : index
    %4 = vector.load %arg3[%c0_2, %c0_3] : memref<128x128xbf16, #tpu.memory_space<vmem>>, vector<128x128xbf16>
    %cst = arith.constant dense<0.000000e+00> : vector<128x128xf32>
    %5 = tpu.matmul %3, %4, %cst {dimension_numbers = #tpu.dot_dimension_numbers<[1], [0], [0], [1], [0, 0, 1, 1], [], []>} : vector<128x128xbf16>, vector<128x128xbf16>, vector<128x128xf32> -> vector<128x128xf32>
    %c0_4 = arith.constant 0 : index
    %c0_5 = arith.constant 0 : index
    %6 = vector.load %arg4[%c0_4, %c0_5] : memref<1x128xf32, #tpu.memory_space<vmem>>, vector<1x128xf32>
    %7 = vector.broadcast %6 : vector<1x128xf32> to vector<128x128xf32>
    %8 = arith.addf %5, %7 : vector<128x128xf32>
    %cst_6 = arith.constant 0.000000e+00 : f32
    %9 = vector.broadcast %cst_6 : f32 to vector<128x128xf32>
    %10 = arith.maximumf %8, %9 : vector<128x128xf32>
    %c0_7 = arith.constant 0 : index
    %c0_8 = arith.constant 0 : index
    %11 = vector.load %arg7[%c0_7, %c0_8] : memref<128x128xf32, #tpu.memory_space<vmem>>, vector<128x128xf32>
    %12 = arith.truncf %10 : vector<128x128xf32> to vector<128x128xbf16>
    %c0_9 = arith.constant 0 : index
    %c0_10 = arith.constant 0 : index
    %13 = vector.load %arg5[%c0_9, %c0_10] : memref<128x128xbf16, #tpu.memory_space<vmem>>, vector<128x128xbf16>
    %cst_11 = arith.constant dense<0.000000e+00> : vector<128x128xf32>
    %14 = tpu.matmul %12, %13, %cst_11 {dimension_numbers = #tpu.dot_dimension_numbers<[1], [0], [0], [1], [0, 0, 1, 1], [], []>} : vector<128x128xbf16>, vector<128x128xbf16>, vector<128x128xf32> -> vector<128x128xf32>
    %15 = arith.addf %11, %14 : vector<128x128xf32>
    %c0_12 = arith.constant 0 : index
    %c0_13 = arith.constant 0 : index
    %16 = vector.load %arg7[%c0_12, %c0_13] : memref<128x128xf32, #tpu.memory_space<vmem>>, vector<128x128xf32>
    tpu.vector_store %arg7[%c0_12, %c0_13], %15 {strides = array<i32>} : memref<128x128xf32, #tpu.memory_space<vmem>>, vector<128x128xf32>,
    return
  }
  func.func @transform_0(%arg0: i32, %arg1: i32) -> (i32, i32) {
    %c0_i32 = arith.constant 0 : i32
    %c0_i32_0 = arith.constant 0 : i32
    return %arg0, %c0_i32 : i32, i32
  }
  func.func @transform_1(%arg0: i32, %arg1: i32) -> (i32, i32) {
    %c0_i32 = arith.constant 0 : i32
    %c0_i32_0 = arith.constant 0 : i32
    return %c0_i32, %arg1 : i32, i32
  }
  func.func @transform_2(%arg0: i32, %arg1: i32) -> (i32, i32) {
    %c0_i32 = arith.constant 0 : i32
    %c0_i32_0 = arith.constant 0 : i32
    return %c0_i32, %arg1 : i32, i32
  }
  func.func @transform_3(%arg0: i32, %arg1: i32) -> (i32, i32) {
    %c0_i32 = arith.constant 0 : i32
    %c0_i32_0 = arith.constant 0 : i32
    return %arg1, %c0_i32 : i32, i32
  }
  func.func @transform_4(%arg0: i32, %arg1: i32) -> (i32, i32) {
    %c0_i32 = arith.constant 0 : i32
    %c0_i32_0 = arith.constant 0 : i32
    %c0_i32_1 = arith.constant 0 : i32
    return %c0_i32, %c0_i32_0 : i32, i32
  }
  func.func @transform_5(%arg0: i32, %arg1: i32) -> (i32, i32) {
    %c0_i32 = arith.constant 0 : i32
    %c0_i32_0 = arith.constant 0 : i32
    return %arg0, %c0_i32 : i32, i32
  }
}

</mosaic_0001>

<llo_original>
// kernel: tpu_custom_call.1
$region0: #{tpu_custom_call.1}
  #allocation0 [shape = 'u32[]', space=smem, size = 0x4, offset = 0x4, fixed_abs, tag = 'smem constant byte address 0x4 - core index']
  #allocation1 [shape = 'u32[72,128]{1,0:T(1,128)}', space=vmem, size = 0x9000, scoped, tag = 'internal scratch']
  %s0 = inlined_call_operand.hbm [shape: bf16[128,128], index: 0, kind: input, shape index: {}]
  %s1 = inlined_call_operand.hbm [shape: bf16[128,128], index: 1, kind: input, shape index: {}]
  %s2 = inlined_call_operand.vmem [shape: f32[1,128], index: 2, kind: input, shape index: {}]
  %s3 = inlined_call_operand.hbm [shape: bf16[128,128], index: 3, kind: input, shape index: {}]
  %s4 = inlined_call_operand.vmem [shape: f32[1,128], index: 4, kind: input, shape index: {}]
  %s5 = inlined_call_operand.hbm [shape: f32[128,128], index: 5, kind: output, shape index: {}]
  %s6 = sld [smem:[#allocation0]]
  $region46: #{tpu_custom_call.1} parent=0
    _
  %s8 = ssub.s32 1, %s6
  %s9 = scalar_select 0, %s8, %s6
  $region1: #{tpu_custom_call.1} parent=0
    #allocation2 [shape = 'u8[32768]{0}', space=vmem, size = 0x8000, scoped, tag = 'input window, operand 0, single buffered']
    #allocation3 [shape = 's32[1]{0}', space=sflag, size = 0x4, scoped, tag = 'scoped memory for tpu_custom_call.1']
    #allocation4 [shape = 's32[1]{0}', space=sflag, size = 0x4, scoped, tag = 'scoped memory for tpu_custom_call.1']
    #allocation5 [shape = 'u8[32768]{0}', space=vmem, size = 0x8000, scoped, tag = 'input window, operand 1, single buffered']
    #allocation6 [shape = 's32[1]{0}', space=sflag, size = 0x4, scoped, tag = 'scoped memory for tpu_custom_call.1']
    #allocation7 [shape = 'u8[32768]{0}', space=vmem, size = 0x8000, scoped, tag = 'input window, operand 3, single buffered']
    #allocation8 [shape = 'u8[65536]{0}', space=vmem, size = 0x10000, scoped, tag = 'output window, operand 0, single buffered']
    %10 = vsyncpa [#allocation3], 0
    %11 = vsyncpa [#allocation6], 0
    %12 = vsyncpa [#allocation4], 0
    // Predicated region
    $region2: #{tpu_custom_call.1} parent=1 // pred_check
      _
    $region3: #{tpu_custom_call.1} parent=1 // pred_check_branch
      %14 = sbr.rel (0) target = $region5
    $region4: #{tpu_custom_call.1} parent=1 // pred_region
      %16 = vsyncadd [#allocation3], 0
      %s17 = sshll.u32 %s0, 4
      %s18 = int_to_ptr.hbm [resolvable:$true] %s17
      %s19 = sshll.u32 [#allocation2], 4
      %s20 = int_to_ptr.vmem [resolvable:$true] %s19
      %25 = dma.hbm_to_vmem [thread:$0]  %s18, 1024, %s20, [#allocation3], 64, 64, 4
    $region5: #{tpu_custom_call.1} parent=1 // pred_fallthru
      _
    // Predicated region
    $region6: #{tpu_custom_call.1} parent=1 // pred_check
      _
    $region7: #{tpu_custom_call.1} parent=1 // pred_check_branch
      %27 = sbr.rel (0) target = $region9
    $region8: #{tpu_custom_call.1} parent=1 // pred_region
      %29 = vsyncadd [#allocation6], 0
      %s30 = sshll.u32 %s1, 4
      %s31 = int_to_ptr.hbm [resolvable:$true] %s30
      %s32 = sshll.u32 [#allocation5], 4
      %s33 = int_to_ptr.vmem [resolvable:$true] %s32
      %38 = dma.hbm_to_vmem [thread:$0]  %s31, 1024, %s33, [#allocation6], 64, 64, 4
    $region9: #{tpu_custom_call.1} parent=1 // pred_fallthru
      _
    // Predicated region
    $region10: #{tpu_custom_call.1} parent=1 // pred_check
      _
    $region11: #{tpu_custom_call.1} parent=1 // pred_check_branch
      %40 = sbr.rel (0) target = $region13
    $region12: #{tpu_custom_call.1} parent=1 // pred_region
      _
    $region13: #{tpu_custom_call.1} parent=1 // pred_fallthru
      _
    // Predicated region
    $region14: #{tpu_custom_call.1} parent=1 // pred_check
      _
    $region15: #{tpu_custom_call.1} parent=1 // pred_check_branch
      %42 = sbr.rel (0) target = $region17
    $region16: #{tpu_custom_call.1} parent=1 // pred_region
      %44 = vsyncadd [#allocation6], 0
      %s45 = sshll.u32 %s3, 4
      %s46 = int_to_ptr.hbm [resolvable:$true] %s45
      %s47 = sshll.u32 [#allocation7], 4
      %s48 = int_to_ptr.vmem [resolvable:$true] %s47
      %53 = dma.hbm_to_vmem [thread:$0]  %s46, 1024, %s48, [#allocation6], 64, 64, 4
    $region17: #{tpu_custom_call.1} parent=1 // pred_fallthru
      _
    // Predicated region
    $region18: #{tpu_custom_call.1} parent=1 // pred_check
      _
    $region19: #{tpu_custom_call.1} parent=1 // pred_check_branch
      %55 = sbr.rel (0) target = $region21
    $region20: #{tpu_custom_call.1} parent=1 // pred_region
      _
    $region21: #{tpu_custom_call.1} parent=1 // pred_fallthru
      _
    // Predicated region
    $region22: #{tpu_custom_call.1} parent=1 // pred_check
      _
    $region23: #{tpu_custom_call.1} parent=1 // pred_check_branch
      %57 = sbr.rel (0) target = $region25
    $region24: #{tpu_custom_call.1} parent=1 // pred_region
      %59 = dma.done [#allocation3], 1024
    $region25: #{tpu_custom_call.1} parent=1 // pred_fallthru
      _
    // Predicated region
    $region26: #{tpu_custom_call.1} parent=1 // pred_check
      _
    $region27: #{tpu_custom_call.1} parent=1 // pred_check_branch
      %61 = sbr.rel (0) target = $region29
    $region28: #{tpu_custom_call.1} parent=1 // pred_region
      %63 = dma.done [#allocation6], 1024
    $region29: #{tpu_custom_call.1} parent=1 // pred_fallthru
      _
    // Predicated region
    $region30: #{tpu_custom_call.1} parent=1 // pred_check
      _
    $region31: #{tpu_custom_call.1} parent=1 // pred_check_branch
      %65 = sbr.rel (0) target = $region33
    $region32: #{tpu_custom_call.1} parent=1 // pred_region
      %67 = dma.done [#allocation6], 1024
    $region33: #{tpu_custom_call.1} parent=1 // pred_fallthru
      _
    %p68 = scmp.eq.s32.totalorder 0, 0
    // Predicated region
    $region34: #{tpu_custom_call.1} parent=1 // pred_check
      %p69 = pneg %p68
    $region35: #{tpu_custom_call.1} parent=1 // pred_check_branch
      %71 = sbr.rel (%p69) target = $region37
    $region36: #{tpu_custom_call.1} parent=1 // pred_region
      %v72 = vld [vmem:[%s4] sm:$0x1]
      %v74 = vperm.slane %v72, 0
      %76 = vst [vmem:[#allocation8] sm:$0xff] %v74
      %77 = vst [vmem:[#allocation8 + $0x8] sm:$0xff] %v74
      %78 = vst [vmem:[#allocation8 + $0x10] sm:$0xff] %v74
      %79 = vst [vmem:[#allocation8 + $0x18] sm:$0xff] %v74
      %80 = vst [vmem:[#allocation8 + $0x20] sm:$0xff] %v74
      %81 = vst [vmem:[#allocation8 + $0x28] sm:$0xff] %v74
      %82 = vst [vmem:[#allocation8 + $0x30] sm:$0xff] %v74
      %83 = vst [vmem:[#allocation8 + $0x38] sm:$0xff] %v74
      %84 = vst [vmem:[#allocation8 + $0x40] sm:$0xff] %v74
      %85 = vst [vmem:[#allocation8 + $0x48] sm:$0xff] %v74
      %86 = vst [vmem:[#allocation8 + $0x50] sm:$0xff] %v74
      %87 = vst [vmem:[#allocation8 + $0x58] sm:$0xff] %v74
      %88 = vst [vmem:[#allocation8 + $0x60] sm:$0xff] %v74
      %89 = vst [vmem:[#allocation8 + $0x68] sm:$0xff] %v74
      %90 = vst [vmem:[#allocation8 + $0x70] sm:$0xff] %v74
      %91 = vst [vmem:[#allocation8 + $0x78] sm:$0xff] %v74
    $region37: #{tpu_custom_call.1} parent=1 // pred_fallthru
      _
    %v92 = vld [vmem:[#allocation2] sm:$0xf]
    %v93 = vld [vmem:[#allocation2 + $0x4] sm:$0xf]
    %v94 = vld [vmem:[#allocation2 + $0x8] sm:$0xf]
    %v95 = vld [vmem:[#allocation2 + $0xc] sm:$0xf]
    %v96 = vld [vmem:[#allocation2 + $0x10] sm:$0xf]
    %v97 = vld [vmem:[#allocation2 + $0x14] sm:$0xf]
    %v98 = vld [vmem:[#allocation2 + $0x18] sm:$0xf]
    %v99 = vld [vmem:[#allocation2 + $0x1c] sm:$0xf]
    %v100 = vld [vmem:[#allocation2 + $0x20] sm:$0xf]
    %v101 = vld [vmem:[#allocation2 + $0x24] sm:$0xf]
    %v102 = vld [vmem:[#allocation2 + $0x28] sm:$0xf]
    %v103 = vld [vmem:[#allocation2 + $0x2c] sm:$0xf]
    %v104 = vld [vmem:[#allocation2 + $0x30] sm:$0xf]
    %v105 = vld [vmem:[#allocation2 + $0x34] sm:$0xf]
    %v106 = vld [vmem:[#allocation2 + $0x38] sm:$0xf]
    %v107 = vld [vmem:[#allocation2 + $0x3c] sm:$0xf]
    %v108 = vld [vmem:[#allocation5] sm:$0xf]
    %v109 = vld [vmem:[#allocation5 + $0x4] sm:$0xf]
    %v110 = vld [vmem:[#allocation5 + $0x8] sm:$0xf]
    %v111 = vld [vmem:[#allocation5 + $0xc] sm:$0xf]
    %v112 = vld [vmem:[#allocation5 + $0x10] sm:$0xf]
    %v113 = vld [vmem:[#allocation5 + $0x14] sm:$0xf]
    %v114 = vld [vmem:[#allocation5 + $0x18] sm:$0xf]
    %v115 = vld [vmem:[#allocation5 + $0x1c] sm:$0xf]
    %v116 = vld [vmem:[#allocation5 + $0x20] sm:$0xf]
    %v117 = vld [vmem:[#allocation5 + $0x24] sm:$0xf]
    %v118 = vld [vmem:[#allocation5 + $0x28] sm:$0xf]
    %v119 = vld [vmem:[#allocation5 + $0x2c] sm:$0xf]
    %v120 = vld [vmem:[#allocation5 + $0x30] sm:$0xf]
    %v121 = vld [vmem:[#allocation5 + $0x34] sm:$0xf]
    %v122 = vld [vmem:[#allocation5 + $0x38] sm:$0xf]
    %v123 = vld [vmem:[#allocation5 + $0x3c] sm:$0xf]
    %v124 = vld [vmem:[%s2] sm:$0x1]
    %v126 = vperm.slane %v124, 0
    %v144 = vunpack.c.l.b16 %v92
    %v145 = vunpack.c.l.b16 %v93
    %v146 = vunpack.c.l.b16 %v94
    %v147 = vunpack.c.l.b16 %v95
    %v148 = vunpack.c.l.b16 %v96
    %v149 = vunpack.c.l.b16 %v97
    %v150 = vunpack.c.l.b16 %v98
    %v151 = vunpack.c.l.b16 %v99
    %v152 = vunpack.c.l.b16 %v100
    %v153 = vunpack.c.l.b16 %v101
    %v154 = vunpack.c.l.b16 %v102
    %v155 = vunpack.c.l.b16 %v103
    %v156 = vunpack.c.l.b16 %v104
    %v157 = vunpack.c.l.b16 %v105
    %v158 = vunpack.c.l.b16 %v106
    %v159 = vunpack.c.l.b16 %v107
    %v160 = vpack.c.b16 %v145, %v144
    %v161 = vpack.c.b16 %v147, %v146
    %v162 = vpack.c.b16 %v149, %v148
    %v163 = vpack.c.b16 %v151, %v150
    %v164 = vpack.c.b16 %v153, %v152
    %v165 = vpack.c.b16 %v155, %v154
    %v166 = vpack.c.b16 %v157, %v156
    %v167 = vpack.c.b16 %v159, %v158
    %v192 = vunpack.c.l.b16 %v108
    %v193 = vunpack.c.l.b16 %v109
    %v194 = vunpack.c.l.b16 %v110
    %v195 = vunpack.c.l.b16 %v111
    %v196 = vunpack.c.l.b16 %v112
    %v197 = vunpack.c.l.b16 %v113
    %v198 = vunpack.c.l.b16 %v114
    %v199 = vunpack.c.l.b16 %v115
    %v200 = vunpack.c.l.b16 %v116
    %v201 = vunpack.c.l.b16 %v117
    %v202 = vunpack.c.l.b16 %v118
    %v203 = vunpack.c.l.b16 %v119
    %v204 = vunpack.c.l.b16 %v120
    %v205 = vunpack.c.l.b16 %v121
    %v206 = vunpack.c.l.b16 %v122
    %v207 = vunpack.c.l.b16 %v123
    %v208 = vpack.c.b16 %v193, %v192
    %v209 = vpack.c.b16 %v195, %v194
    %v210 = vpack.c.b16 %v197, %v196
    %v211 = vpack.c.b16 %v199, %v198
    %v212 = vpack.c.b16 %v201, %v200
    %v213 = vpack.c.b16 %v203, %v202
    %v214 = vpack.c.b16 %v205, %v204
    %v215 = vpack.c.b16 %v207, %v206
    %224 = vmatpush.bf16.msra.mxu0 %v215
    %225 = vmatpush.bf16.msra.mxu0 %v214
    %226 = vmatpush.bf16.msra.mxu0 %v213
    %227 = vmatpush.bf16.msra.mxu0 %v212
    %228 = vmatpush.bf16.msra.mxu0 %v211
    %229 = vmatpush.bf16.msra.mxu0 %v210
    %230 = vmatpush.bf16.msra.mxu0 %v209
    %231 = vmatpush.bf16.msra.mxu0 %v208
    %232 = vmatmul.bf16.gmra.mxu0 %v160
    %v233 = vpop.f32.mrf.mxu0
    %v234 = vadd.f32 %v126, %v233
    %v235 = vpop.f32.mrf.mxu0
    %v236 = vadd.f32 %v126, %v235
    %237 = vmatmul.bf16.gmra.mxu0 %v161
    %v238 = vpop.f32.mrf.mxu0
    %v239 = vadd.f32 %v126, %v238
    %v240 = vpop.f32.mrf.mxu0
    %v241 = vadd.f32 %v126, %v240
    %242 = vmatmul.bf16.gmra.mxu0 %v162
    %v243 = vpop.f32.mrf.mxu0
    %v244 = vadd.f32 %v126, %v243
    %v245 = vpop.f32.mrf.mxu0
    %v246 = vadd.f32 %v126, %v245
    %247 = vmatmul.bf16.gmra.mxu0 %v163
    %v248 = vpop.f32.mrf.mxu0
    %v249 = vadd.f32 %v126, %v248
    %v250 = vpop.f32.mrf.mxu0
    %v251 = vadd.f32 %v126, %v250
    %252 = vmatmul.bf16.gmra.mxu0 %v164
    %v253 = vpop.f32.mrf.mxu0
    %v254 = vadd.f32 %v126, %v253
    %v255 = vpop.f32.mrf.mxu0
    %v256 = vadd.f32 %v126, %v255
    %257 = vmatmul.bf16.gmra.mxu0 %v165
    %v258 = vpop.f32.mrf.mxu0
    %v259 = vadd.f32 %v126, %v258
    %v260 = vpop.f32.mrf.mxu0
    %v261 = vadd.f32 %v126, %v260
    %262 = vmatmul.bf16.gmra.mxu0 %v166
    %v263 = vpop.f32.mrf.mxu0
    %v264 = vadd.f32 %v126, %v263
    %v265 = vpop.f32.mrf.mxu0
    %v266 = vadd.f32 %v126, %v265
    %267 = vmatmul.bf16.gmra.mxu0 %v167
    %v268 = vpop.f32.mrf.mxu0
    %v269 = vadd.f32 %v126, %v268
    %v270 = vpop.f32.mrf.mxu0
    %v271 = vadd.f32 %v126, %v270
    %272 = vdwg.mxu0
    %v273 = vmax.f32 %v234, 0.0
    %v274 = vmax.f32 %v236, 0.0
    %v275 = vmax.f32 %v239, 0.0
    %v276 = vmax.f32 %v241, 0.0
    %v277 = vmax.f32 %v244, 0.0
    %v278 = vmax.f32 %v246, 0.0
    %v279 = vmax.f32 %v249, 0.0
    %v280 = vmax.f32 %v251, 0.0
    %v281 = vmax.f32 %v254, 0.0
    %v282 = vmax.f32 %v256, 0.0
    %v283 = vmax.f32 %v259, 0.0
    %v284 = vmax.f32 %v261, 0.0
    %v285 = vmax.f32 %v264, 0.0
    %v286 = vmax.f32 %v266, 0.0
    %v287 = vmax.f32 %v269, 0.0
    %v288 = vmax.f32 %v271, 0.0
    %v289 = vld [vmem:[#allocation8] sm:$0xff]
    %v290 = vld [vmem:[#allocation8 + $0x8] sm:$0xff]
    %v291 = vld [vmem:[#allocation8 + $0x10] sm:$0xff]
    %v292 = vld [vmem:[#allocation8 + $0x18] sm:$0xff]
    %v293 = vld [vmem:[#allocation8 + $0x20] sm:$0xff]
    %v294 = vld [vmem:[#allocation8 + $0x28] sm:$0xff]
    %v295 = vld [vmem:[#allocation8 + $0x30] sm:$0xff]
    %v296 = vld [vmem:[#allocation8 + $0x38] sm:$0xff]
    %v297 = vld [vmem:[#allocation8 + $0x40] sm:$0xff]
    %v298 = vld [vmem:[#allocation8 + $0x48] sm:$0xff]
    %v299 = vld [vmem:[#allocation8 + $0x50] sm:$0xff]
    %v300 = vld [vmem:[#allocation8 + $0x58] sm:$0xff]
    %v301 = vld [vmem:[#allocation8 + $0x60] sm:$0xff]
    %v302 = vld [vmem:[#allocation8 + $0x68] sm:$0xff]
    %v303 = vld [vmem:[#allocation8 + $0x70] sm:$0xff]
    %v304 = vld [vmem:[#allocation8 + $0x78] sm:$0xff]
    %v305 = vpack.c.bf16 %v274, %v273
    %v306 = vpack.c.bf16 %v276, %v275
    %v307 = vpack.c.bf16 %v278, %v277
    %v308 = vpack.c.bf16 %v280, %v279
    %v309 = vpack.c.bf16 %v282, %v281
    %v310 = vpack.c.bf16 %v284, %v283
    %v311 = vpack.c.bf16 %v286, %v285
    %v312 = vpack.c.bf16 %v288, %v287
    %v313 = vld [vmem:[#allocation7] sm:$0xf]
    %v314 = vld [vmem:[#allocation7 + $0x4] sm:$0xf]
    %v315 = vld [vmem:[#allocation7 + $0x8] sm:$0xf]
    %v316 = vld [vmem:[#allocation7 + $0xc] sm:$0xf]
    %v317 = vld [vmem:[#allocation7 + $0x10] sm:$0xf]
    %v318 = vld [vmem:[#allocation7 + $0x14] sm:$0xf]
    %v319 = vld [vmem:[#allocation7 + $0x18] sm:$0xf]
    %v320 = vld [vmem:[#allocation7 + $0x1c] sm:$0xf]
    %v321 = vld [vmem:[#allocation7 + $0x20] sm:$0xf]
    %v322 = vld [vmem:[#allocation7 + $0x24] sm:$0xf]
    %v323 = vld [vmem:[#allocation7 + $0x28] sm:$0xf]
    %v324 = vld [vmem:[#allocation7 + $0x2c] sm:$0xf]
    %v325 = vld [vmem:[#allocation7 + $0x30] sm:$0xf]
    %v326 = vld [vmem:[#allocation7 + $0x34] sm:$0xf]
    %v327 = vld [vmem:[#allocation7 + $0x38] sm:$0xf]
    %v328 = vld [vmem:[#allocation7 + $0x3c] sm:$0xf]
    %v345 = vunpack.c.l.b16 %v313
    %v346 = vunpack.c.l.b16 %v314
    %v347 = vunpack.c.l.b16 %v315
    %v348 = vunpack.c.l.b16 %v316
    %v349 = vunpack.c.l.b16 %v317
    %v350 = vunpack.c.l.b16 %v318
    %v351 = vunpack.c.l.b16 %v319
    %v352 = vunpack.c.l.b16 %v320
    %v353 = vunpack.c.l.b16 %v321
    %v354 = vunpack.c.l.b16 %v322
    %v355 = vunpack.c.l.b16 %v323
    %v356 = vunpack.c.l.b16 %v324
    %v357 = vunpack.c.l.b16 %v325
    %v358 = vunpack.c.l.b16 %v326
    %v359 = vunpack.c.l.b16 %v327
    %v360 = vunpack.c.l.b16 %v328
    %v361 = vpack.c.b16 %v346, %v345
    %v362 = vpack.c.b16 %v348, %v347
    %v363 = vpack.c.b16 %v350, %v349
    %v364 = vpack.c.b16 %v352, %v351
    %v365 = vpack.c.b16 %v354, %v353
    %v366 = vpack.c.b16 %v356, %v355
    %v367 = vpack.c.b16 %v358, %v357
    %v368 = vpack.c.b16 %v360, %v359
    %377 = vmatpush.bf16.msra.mxu0 %v368
    %378 = vmatpush.bf16.msra.mxu0 %v367
    %379 = vmatpush.bf16.msra.mxu0 %v366
    %380 = vmatpush.bf16.msra.mxu0 %v365
    %381 = vmatpush.bf16.msra.mxu0 %v364
    %382 = vmatpush.bf16.msra.mxu0 %v363
    %383 = vmatpush.bf16.msra.mxu0 %v362
    %384 = vmatpush.bf16.msra.mxu0 %v361
    %385 = vmatmul.bf16.gmra.mxu0 %v305
    %v386 = vpop.f32.mrf.mxu0
    %v387 = vadd.f32 0.0, %v386
    %v388 = vpop.f32.mrf.mxu0
    %v389 = vadd.f32 0.0, %v388
    %390 = vmatmul.bf16.gmra.mxu0 %v306
    %v391 = vpop.f32.mrf.mxu0
    %v392 = vadd.f32 0.0, %v391
    %v393 = vpop.f32.mrf.mxu0
    %v394 = vadd.f32 0.0, %v393
    %395 = vmatmul.bf16.gmra.mxu0 %v307
    %v396 = vpop.f32.mrf.mxu0
    %v397 = vadd.f32 0.0, %v396
    %v398 = vpop.f32.mrf.mxu0
    %v399 = vadd.f32 0.0, %v398
    %400 = vmatmul.bf16.gmra.mxu0 %v308
    %v401 = vpop.f32.mrf.mxu0
    %v402 = vadd.f32 0.0, %v401
    %v403 = vpop.f32.mrf.mxu0
    %v404 = vadd.f32 0.0, %v403
    %405 = vmatmul.bf16.gmra.mxu0 %v309
    %v406 = vpop.f32.mrf.mxu0
    %v407 = vadd.f32 0.0, %v406
    %v408 = vpop.f32.mrf.mxu0
    %v409 = vadd.f32 0.0, %v408
    %410 = vmatmul.bf16.gmra.mxu0 %v310
    %v411 = vpop.f32.mrf.mxu0
    %v412 = vadd.f32 0.0, %v411
    %v413 = vpop.f32.mrf.mxu0
    %v414 = vadd.f32 0.0, %v413
    %415 = vmatmul.bf16.gmra.mxu0 %v311
    %v416 = vpop.f32.mrf.mxu0
    %v417 = vadd.f32 0.0, %v416
    %v418 = vpop.f32.mrf.mxu0
    %v419 = vadd.f32 0.0, %v418
    %420 = vmatmul.bf16.gmra.mxu0 %v312
    %v421 = vpop.f32.mrf.mxu0
    %v422 = vadd.f32 0.0, %v421
    %v423 = vpop.f32.mrf.mxu0
    %v424 = vadd.f32 0.0, %v423
    %425 = vdwg.mxu0
    %v426 = vadd.f32 %v289, %v387
    %v427 = vadd.f32 %v290, %v389
    %v428 = vadd.f32 %v291, %v392
    %v429 = vadd.f32 %v292, %v394
    %v430 = vadd.f32 %v293, %v397
    %v431 = vadd.f32 %v294, %v399
    %v432 = vadd.f32 %v295, %v402
    %v433 = vadd.f32 %v296, %v404
    %v434 = vadd.f32 %v297, %v407
    %v435 = vadd.f32 %v298, %v409
    %v436 = vadd.f32 %v299, %v412
    %v437 = vadd.f32 %v300, %v414
    %v438 = vadd.f32 %v301, %v417
    %v439 = vadd.f32 %v302, %v419
    %v440 = vadd.f32 %v303, %v422
    %v441 = vadd.f32 %v304, %v424
    %442 = vst [vmem:[#allocation8] sm:$0xff] %v426
    %443 = vst [vmem:[#allocation8 + $0x8] sm:$0xff] %v427
    %444 = vst [vmem:[#allocation8 + $0x10] sm:$0xff] %v428
    %445 = vst [vmem:[#allocation8 + $0x18] sm:$0xff] %v429
    %446 = vst [vmem:[#allocation8 + $0x20] sm:$0xff] %v430
    %447 = vst [vmem:[#allocation8 + $0x28] sm:$0xff] %v431
    %448 = vst [vmem:[#allocation8 + $0x30] sm:$0xff] %v432
    %449 = vst [vmem:[#allocation8 + $0x38] sm:$0xff] %v433
    %450 = vst [vmem:[#allocation8 + $0x40] sm:$0xff] %v434
    %451 = vst [vmem:[#allocation8 + $0x48] sm:$0xff] %v435
    %452 = vst [vmem:[#allocation8 + $0x50] sm:$0xff] %v436
    %453 = vst [vmem:[#allocation8 + $0x58] sm:$0xff] %v437
    %454 = vst [vmem:[#allocation8 + $0x60] sm:$0xff] %v438
    %455 = vst [vmem:[#allocation8 + $0x68] sm:$0xff] %v439
    %456 = vst [vmem:[#allocation8 + $0x70] sm:$0xff] %v440
    %457 = vst [vmem:[#allocation8 + $0x78] sm:$0xff] %v441
    // Predicated region
    $region38: #{tpu_custom_call.1} parent=1 // pred_check
      _
    $region39: #{tpu_custom_call.1} parent=1 // pred_check_branch
      %459 = sbr.rel (0) target = $region41
    $region40: #{tpu_custom_call.1} parent=1 // pred_region
      %461 = vsyncadd [#allocation4], 0
      %s462 = sshll.u32 [#allocation8], 4
      %s463 = int_to_ptr.vmem [resolvable:$true] %s462
      %s464 = sshll.u32 %s5, 4
      %s465 = int_to_ptr.hbm [resolvable:$true] %s464
      %470 = dma.vmem_to_hbm [thread:$0]  %s463, 2048, %s465, [#allocation4], 128, 128, 8
    $region41: #{tpu_custom_call.1} parent=1 // pred_fallthru
      _
    // Predicated region
    $region42: #{tpu_custom_call.1} parent=1 // pred_check
      _
    $region43: #{tpu_custom_call.1} parent=1 // pred_check_branch
      %472 = sbr.rel (0) target = $region45
    $region44: #{tpu_custom_call.1} parent=1 // pred_region
      %474 = dma.done [#allocation4], 2048
    $region45: #{tpu_custom_call.1} parent=1 // pred_fallthru
      _
    %475 = vsyncpa [#allocation3], 1
    %476 = vsyncpa [#allocation6], 1
    %477 = vsyncpa [#allocation4], 1

</llo_original>
